<compile_context>
chip_gen: v5e
topology: v5e:2x2
jax: 0.10.0
libtpu: 0.0.40
codegen_flags: <defaults>
</compile_context>

<pallas_src>
import functools

import jax
import jax.numpy as jnp
import numpy as np
from jax.experimental import pallas as pl
from jax.experimental.pallas import tpu as pltpu

_F32 = jnp.float32
_BF16 = jnp.bfloat16
_MAX_BH_BLOCK = 32   # cap on heads per grid step (bounds the unrolled per-head PV loop)
_MAX_TQ = 512        # cap on the query tile


# ----------------------------------------------------------------------------- kernel
def _sdpa_kernel(scale_ref, *refs, b_bh, d_v, has_prev, has_attn_bias, has_key_bias,
                 emit_attn, emit_scores, pack_out, store_attn_bf16, approx_recip):
    """One (BH-block, q-tile) per grid step.

    Block shapes:
      q_ref      : (B, TQ, d_k)        bf16
      k_ref      : (B, d_k, S)         bf16
      v_ref      : (B, S,  d_v)        bf16
      prev_ref   : (B, TQ, S)          (optional, input dtype)
      amask_ref  : (TQ, S)             f32 additive (optional, shared across heads)
      kbias_ref  : (B, 1, S)           f32 additive (optional, per bs*n_heads slice)
      out_ref    : (1, TQ, B*d_v)      packed lane-dense  |  (B, TQ, d_v) natural
      attn_ref   : (B, TQ, S)          (optional)
      scores_ref : (B, TQ, S)          (optional)
    """
    it = iter(refs)
    q_ref, k_ref, v_ref = next(it), next(it), next(it)
    prev_ref = next(it) if has_prev else None
    amask_ref = next(it) if has_attn_bias else None
    kbias_ref = next(it) if has_key_bias else None
    out_ref = next(it)
    attn_ref = next(it) if emit_attn else None
    scores_ref = next(it) if emit_scores else None

    scale = scale_ref[0]
    # Fold scale into q (b_bh*tq*d_k multiplies instead of b_bh*tq*S on the scores).
    q = (q_ref[...].astype(_F32) * scale).astype(_BF16)   # (B, TQ, d_k)
    k = k_ref[...]                                         # (B, d_k, S)
    v = v_ref[...]                                         # (B, S, d_v)

    # attn_scores = matmul(q*scale, k) (+ prev / masks).  MXU bf16 operands, f32 accumulate.
    scores = jnp.einsum("bqd,bds->bqs", q, k, preferred_element_type=_F32)
    if has_prev:
        scores = scores + prev_ref[...].astype(_F32)
    if has_attn_bias:
        scores = scores + amask_ref[...][None, :, :]       # broadcast over heads
    if has_key_bias:
        scores = scores + kbias_ref[...]                   # (B,1,S) broadcasts over TQ
    if emit_scores:
        scores_ref[...] = scores.astype(scores_ref.dtype)

    # Numerically stable softmax over the key axis (f32 on VPU/EUP).
    m = jnp.max(scores, axis=-1, keepdims=True)
    p = jnp.exp(scores - m)
    denom = jnp.sum(p, axis=-1, keepdims=True)
    inv = pl.reciprocal(denom, approx=True) if approx_recip else 1.0 / denom
    attn = p * inv
    attn_lo = attn.astype(_BF16)                           # single cast, reused for store + PV
    if emit_attn:
        attn_ref[...] = attn_lo if store_attn_bf16 else attn.astype(attn_ref.dtype)

    # output = matmul(attn_weights, v) on the MXU.
    if pack_out:
        # Per-head matmul, each result written to a static lane slice -> lane-dense writeback.
        for h in range(b_bh):
            o_h = jnp.dot(attn_lo[h], v[h], preferred_element_type=_F32)   # (TQ, d_v)
            out_ref[0, :, h * d_v:(h + 1) * d_v] = o_h.astype(out_ref.dtype)
    else:
        out = jnp.einsum("bqs,bsd->bqd", attn_lo, v, preferred_element_type=_F32)
        out_ref[...] = out.astype(out_ref.dtype)


# ----------------------------------------------------------------------------- tiling
def _vmem_budget():
    """(tile-selection budget, vmem_limit_bytes) scaled to the part's VMEM capacity."""
    try:
        cap = int(pltpu.get_tpu_info().vmem_capacity_bytes)
    except Exception:
        cap = 64 * 1024 * 1024   # conservative (v7x-sized) fallback
    return int(cap * 0.60), int(cap * 0.75)


def _step_vmem_bytes(b, tq, S, d_k, d_v, prev_bytes, has_attn_bias, has_key_bias,
                     out_bytes, attn_bytes, scores_bytes):
    """Per-grid-step VMEM estimate: 2x (double-buffered streams) + f32 intermediates."""
    stream_in = b * tq * d_k * 2 + b * d_k * S * 2 + b * S * d_v * 2
    if prev_bytes:
        stream_in += b * tq * S * prev_bytes
    if has_attn_bias:
        stream_in += tq * S * 4
    if has_key_bias:
        stream_in += b * S * 4
    stream_out = b * tq * d_v * out_bytes
    if attn_bytes:
        stream_out += b * tq * S * attn_bytes
    if scores_bytes:
        stream_out += b * tq * S * scores_bytes
    interm = 4 * b * tq * S * 4   # f32 scores / exp / attn temporaries (+ slack)
    return 2 * (stream_in + stream_out) + interm


def _choose_tq(q_len, cap):
    """Query tile: full q_len when it fits, else a mult-of-8 divisor, else pad (fallback)."""
    if q_len <= cap:
        return q_len, q_len
    start = cap - (cap % 8)
    best = 0
    for t in range(start, 7, -8):
        if q_len % t == 0:
            best = t
            break
    if best >= max(8, cap // 4):
        return best, q_len
    tq = start
    q_len_pad = -(-q_len // tq) * tq
    return tq, q_len_pad


def _select_tiling(BH, q_len, S, d_k, d_v, budget, prev_bytes, has_attn_bias,
                   has_key_bias, out_bytes, attn_bytes, scores_bytes):
    divs = [d for d in range(1, BH + 1) if BH % d == 0 and d <= _MAX_BH_BLOCK]
    tq_cap = _MAX_TQ
    while True:
        tq, q_len_pad = _choose_tq(q_len, tq_cap)
        n_q_tiles = q_len_pad // tq
        allowed = divs
        if n_q_tiles == 1 and BH >= 2:
            # Keep >=2 grid steps so a 2-TensorCore part (v7x) gets parallel work; on 1-TC
            # parts this only adds ~0.35us of per-step overhead.
            allowed = [d for d in divs if d < BH] or [1]
        fits = [d for d in allowed
                if _step_vmem_bytes(d, tq, S, d_k, d_v, prev_bytes, has_attn_bias,
                                    has_key_bias, out_bytes, attn_bytes,
                                    scores_bytes) <= budget]
        if fits:
            return max(fits), tq, q_len_pad, n_q_tiles
        if tq <= 8 or tq_cap <= 8:
            return 1, tq, q_len_pad, n_q_tiles   # best effort
        tq_cap = max(8, tq_cap // 2)


# ----------------------------------------------------------------------------- wrapper
def scaled_dot_product_attention(q, k, v, scale, prev=None, key_padding_mask=None,
                                 attn_mask=None, res_attention=False,
                                 return_attn_weights=True, attn_dtype=None,
                                 approx_reciprocal=True):
    """Pallas TPU implementation of _ScaledDotProductAttention.forward.

    q:    [bs, n_heads, q_len, d_k]
    k:    [bs, n_heads, d_k, seq_len]
    v:    [bs, n_heads, seq_len, d_v]
    prev: optional [bs, n_heads, q_len, seq_len]
    key_padding_mask: optional bool [bs, seq_len] (True = masked out)
    attn_mask: optional [q_len, seq_len] or [1, q_len, seq_len]; bool (True = masked) or float (additive)
    """
    out_dtype = q.dtype
    bs, n_heads, q_len, d_k = q.shape
    seq_len = k.shape[-1]
    d_v = v.shape[-1]
    BH = bs * n_heads

    has_prev = prev is not None
    has_attn_bias = attn_mask is not None
    has_key_bias = key_padding_mask is not None
    emit_attn = bool(return_attn_weights)
    emit_scores = bool(res_attention)
    attn_store_dtype = np.dtype(attn_dtype) if attn_dtype is not None else np.dtype(out_dtype)
    store_attn_bf16 = attn_store_dtype == np.dtype(_BF16)

    # bf16 MXU operands (halves q/k/v HBM traffic); softmax + accumulation stay f32.
    qf = q.reshape(BH, q_len, d_k).astype(_BF16)
    kf = k.reshape(BH, d_k, seq_len).astype(_BF16)
    vf = v.reshape(BH, seq_len, d_v).astype(_BF16)

    prev_f = prev.reshape(BH, q_len, seq_len) if has_prev else None

    attn_bias = None
    if has_attn_bias:
        am = attn_mask
        if am.ndim == 3:
            am = am[0]                                     # [1, q_len, seq_len] -> [q_len, seq_len]
        if am.dtype == jnp.bool_:
            attn_bias = jnp.where(am, -jnp.inf, 0.0).astype(_F32)
        else:
            attn_bias = am.astype(_F32)

    key_bias = None
    if has_key_bias:
        kb = jnp.where(key_padding_mask, -jnp.inf, 0.0).astype(_F32)        # [bs, seq_len]
        key_bias = jnp.broadcast_to(kb[:, None, :], (bs, n_heads, seq_len))
        key_bias = key_bias.reshape(BH, 1, seq_len)                          # tiny: BH*S f32

    prev_bytes = prev_f.dtype.itemsize if has_prev else 0
    out_bytes = np.dtype(out_dtype).itemsize
    attn_bytes = attn_store_dtype.itemsize if emit_attn else 0
    scores_bytes = out_bytes if emit_scores else 0

    budget, vmem_limit = _vmem_budget()
    b_bh, tq, q_len_pad, n_q_tiles = _select_tiling(
        BH, q_len, seq_len, d_k, d_v, budget, prev_bytes, has_attn_bias,
        has_key_bias, out_bytes, attn_bytes, scores_bytes)
    n_bh_blocks = BH // b_bh

    if q_len_pad != q_len:   # rare fallback; padded rows are discarded after the call
        dq = q_len_pad - q_len
        qf = jnp.pad(qf, ((0, 0), (0, dq), (0, 0)))
        if has_prev:
            prev_f = jnp.pad(prev_f, ((0, 0), (0, dq), (0, 0)))
        if has_attn_bias:
            attn_bias = jnp.pad(attn_bias, ((0, dq), (0, 0)))

    pack_out = (d_v < 128) and (b_bh > 1)

    scale_arr = jnp.asarray(scale, dtype=_F32).reshape((1,))

    in_specs = [
        pl.BlockSpec((b_bh, tq, d_k),      lambda i, j, s: (i, j, 0)),
        pl.BlockSpec((b_bh, d_k, seq_len), lambda i, j, s: (i, 0, 0)),
        pl.BlockSpec((b_bh, seq_len, d_v), lambda i, j, s: (i, 0, 0)),
    ]
    inputs = [scale_arr, qf, kf, vf]
    if has_prev:
        in_specs.append(pl.BlockSpec((b_bh, tq, seq_len), lambda i, j, s: (i, j, 0)))
        inputs.append(prev_f)
    if has_attn_bias:
        in_specs.append(pl.BlockSpec((tq, seq_len), lambda i, j, s: (j, 0)))
        inputs.append(attn_bias)
    if has_key_bias:
        in_specs.append(pl.BlockSpec((b_bh, 1, seq_len), lambda i, j, s: (i, 0, 0)))
        inputs.append(key_bias)

    out_specs = []
    out_shapes = []
    if pack_out:
        out_specs.append(pl.BlockSpec((1, tq, b_bh * d_v), lambda i, j, s: (i, j, 0)))
        out_shapes.append(jax.ShapeDtypeStruct((n_bh_blocks, q_len_pad, b_bh * d_v), out_dtype))
    else:
        out_specs.append(pl.BlockSpec((b_bh, tq, d_v), lambda i, j, s: (i, j, 0)))
        out_shapes.append(jax.ShapeDtypeStruct((BH, q_len_pad, d_v), out_dtype))
    if emit_attn:
        out_specs.append(pl.BlockSpec((b_bh, tq, seq_len), lambda i, j, s: (i, j, 0)))
        out_shapes.append(jax.ShapeDtypeStruct((BH, q_len_pad, seq_len), attn_store_dtype))
    if emit_scores:
        out_specs.append(pl.BlockSpec((b_bh, tq, seq_len), lambda i, j, s: (i, j, 0)))
        out_shapes.append(jax.ShapeDtypeStruct((BH, q_len_pad, seq_len), out_dtype))

    kernel = functools.partial(
        _sdpa_kernel, b_bh=b_bh, d_v=d_v, has_prev=has_prev,
        has_attn_bias=has_attn_bias, has_key_bias=has_key_bias,
        emit_attn=emit_attn, emit_scores=emit_scores, pack_out=pack_out,
        store_attn_bf16=store_attn_bf16, approx_recip=approx_reciprocal)

    grid_spec = pltpu.PrefetchScalarGridSpec(
        num_scalar_prefetch=1,                 # scale lives in SMEM
        grid=(n_bh_blocks, n_q_tiles),
        in_specs=in_specs,
        out_specs=out_specs,
    )

    results = pl.pallas_call(
        kernel,
        grid_spec=grid_spec,
        out_shape=tuple(out_shapes),
        compiler_params=pltpu.CompilerParams(
            dimension_semantics=("parallel", "parallel"),
            vmem_limit_bytes=vmem_limit,
        ),
    )(*inputs)

    ridx = 0
    out_p = results[ridx]; ridx += 1
    if pack_out:
        out = out_p.reshape(n_bh_blocks, q_len_pad, b_bh, d_v)
        out = jnp.transpose(out, (0, 2, 1, 3)).reshape(BH, q_len_pad, d_v)
    else:
        out = out_p
    out = out[:, :q_len].reshape(bs, n_heads, q_len, d_v)

    attn = None
    if emit_attn:
        attn = results[ridx][:, :q_len].reshape(bs, n_heads, q_len, seq_len); ridx += 1
    if emit_scores:
        scores = results[ridx][:, :q_len].reshape(bs, n_heads, q_len, seq_len)
        return out, attn, scores
    return out, attn


# ----------------------------------------------------------------------------- reference
def _reference(q, k, v, scale, prev=None, key_padding_mask=None, attn_mask=None):
    """Plain-JAX reference mimicking the kernel's quantization points (bf16 operands)."""
    f32, bf16 = jnp.float32, jnp.bfloat16
    hi = jax.lax.Precision.HIGHEST
    qs = (q.astype(bf16).astype(f32) * scale).astype(bf16).astype(f32)
    kb = k.astype(bf16).astype(f32)
    vb = v.astype(bf16).astype(f32)
    s = jnp.einsum("bhqd,bhds->bhqs", qs, kb, precision=hi)
    if prev is not None:
        s = s + prev.astype(f32)
    if attn_mask is not None:
        am = attn_mask[0] if attn_mask.ndim == 3 else attn_mask
        if am.dtype == jnp.bool_:
            s = s + jnp.where(am, -jnp.inf, 0.0).astype(f32)[None, None]
        else:
            s = s + am.astype(f32)[None, None]
    if key_padding_mask is not None:
        s = s + jnp.where(key_padding_mask, -jnp.inf, 0.0).astype(f32)[:, None, None, :]
    a = jax.nn.softmax(s, axis=-1)
    o = jnp.einsum("bhqs,bhsd->bhqd", a.astype(bf16).astype(f32), vb, precision=hi)
    return o, a, s


if __name__ == "__main__":
    # Module config (synthetic, deterministic): d_model=64, n_heads=4 -> head_dim=16
    d_model, n_heads = 64, 4
    head_dim = d_model // n_heads
    scale = head_dim ** (-0.5)            # nn.Parameter(tensor(head_dim**-0.5)), lsa=False

    bs, q_len, seq_len, d_k, d_v = 2, 8, 8, head_dim, head_dim

    key = jax.random.PRNGKey(0)
    kq, kk, kv, kp = jax.random.split(key, 4)
    q = jax.random.normal(kq, (bs, n_heads, q_len, d_k), dtype=jnp.float32)
    k = jax.random.normal(kk, (bs, n_heads, d_k, seq_len), dtype=jnp.float32)
    v = jax.random.normal(kv, (bs, n_heads, seq_len, d_v), dtype=jnp.float32)
    prev = 0.1 * jax.random.normal(kp, (bs, n_heads, q_len, seq_len), dtype=jnp.float32)
    # mask the last two keys of batch 1 (partially-masked rows only -> no NaN rows)
    kpm = jnp.zeros((bs, seq_len), dtype=jnp.bool_).at[1, -2:].set(True)
    # bool causal mask [1, q_len, seq_len] (True = masked) — exercises the attn_mask path
    causal = jnp.triu(jnp.ones((1, q_len, seq_len), dtype=jnp.bool_), k=1)

    # --- variant 1: residual attention + key padding mask + bool attn_mask (scores emitted)
    out, attn, scores = scaled_dot_product_attention(
        q, k, v, scale, prev=prev, key_padding_mask=kpm, attn_mask=causal,
        res_attention=True)
    jax.block_until_ready((out, attn, scores))

    ro, ra, rs = _reference(q, k, v, scale, prev=prev, key_padding_mask=kpm, attn_mask=causal)
    np.testing.assert_allclose(np.asarray(scores), np.asarray(rs), rtol=2e-3, atol=2e-3)
    np.testing.assert_allclose(np.asarray(attn), np.asarray(ra), rtol=1e-2, atol=1e-2)
    np.testing.assert_allclose(np.asarray(out), np.asarray(ro), rtol=1e-2, atol=1e-2)

    # --- variant 2: plain attention (no mask/prev inputs, no scores output, bf16 attn store)
    out2, attn2 = scaled_dot_product_attention(q, k, v, scale, res_attention=False,
                                               attn_dtype=jnp.bfloat16)
    jax.block_until_ready((out2, attn2))

    ro2, ra2, _ = _reference(q, k, v, scale)
    np.testing.assert_allclose(np.asarray(attn2.astype(jnp.float32)), np.asarray(ra2),
                               rtol=2e-2, atol=2e-2)
    np.testing.assert_allclose(np.asarray(out2), np.asarray(ro2), rtol=1e-2, atol=1e-2)

    print("KERNEL_OK")
</pallas_src>

<mosaic_0001>
module attributes {stable_mosaic.version = 11 : i64} {
  func.func @_sdpa_kernel(%arg0: i32, %arg1: i32, %arg2: memref<1xf32, #tpu.memory_space<smem>>, %arg3: memref<4x8x16xbf16, #tpu.memory_space<vmem>>, %arg4: memref<4x16x8xbf16, #tpu.memory_space<vmem>>, %arg5: memref<4x8x16xbf16, #tpu.memory_space<vmem>>, %arg6: memref<4x8x8xf32, #tpu.memory_space<vmem>>, %arg7: memref<8x8xf32, #tpu.memory_space<vmem>>, %arg8: memref<4x1x8xf32, #tpu.memory_space<vmem>>, %arg9: memref<1x8x64xf32, #tpu.memory_space<vmem>>, %arg10: memref<4x8x8xf32, #tpu.memory_space<vmem>>, %arg11: memref<4x8x8xf32, #tpu.memory_space<vmem>>) attributes {dimension_semantics = [#tpu.dimension_semantics<parallel>, #tpu.dimension_semantics<parallel>], iteration_bounds = array<i64: 2, 1>, scalar_prefetch = 1 : i64, scratch_operands = 0 : i64, tpu.core_type = #tpu.core_type<tc>, window_params = [{transform_indices = @transform_0, window_bounds = array<i64: 4, 8, 16>}, {transform_indices = @transform_1, window_bounds = array<i64: 4, 16, 8>}, {transform_indices = @transform_2, window_bounds = array<i64: 4, 8, 16>}, {transform_indices = @transform_3, window_bounds = array<i64: 4, 8, 8>}, {transform_indices = @transform_4, window_bounds = array<i64: 8, 8>}, {transform_indices = @transform_5, window_bounds = array<i64: 4, 1, 8>}, {transform_indices = @transform_6, window_bounds = array<i64: 1, 8, 64>}, {transform_indices = @transform_7, window_bounds = array<i64: 4, 8, 8>}, {transform_indices = @transform_8, window_bounds = array<i64: 4, 8, 8>}]} {
    %c0 = arith.constant 0 : index
    %0 = memref.load %arg2[%c0] : memref<1xf32, #tpu.memory_space<smem>>
    %c0_0 = arith.constant 0 : index
    %c0_1 = arith.constant 0 : index
    %c0_2 = arith.constant 0 : index
    %1 = vector.load %arg3[%c0_0, %c0_1, %c0_2] : memref<4x8x16xbf16, #tpu.memory_space<vmem>>, vector<4x8x16xbf16>
    %2 = arith.extf %1 : vector<4x8x16xbf16> to vector<4x8x16xf32>
    %3 = vector.broadcast %0 : f32 to vector<4x8x16xf32>
    %4 = arith.mulf %2, %3 : vector<4x8x16xf32>
    %5 = arith.truncf %4 : vector<4x8x16xf32> to vector<4x8x16xbf16>
    %c0_3 = arith.constant 0 : index
    %c0_4 = arith.constant 0 : index
    %c0_5 = arith.constant 0 : index
    %6 = vector.load %arg4[%c0_3, %c0_4, %c0_5] : memref<4x16x8xbf16, #tpu.memory_space<vmem>>, vector<4x16x8xbf16>
    %c0_6 = arith.constant 0 : index
    %c0_7 = arith.constant 0 : index
    %c0_8 = arith.constant 0 : index
    %7 = vector.load %arg5[%c0_6, %c0_7, %c0_8] : memref<4x8x16xbf16, #tpu.memory_space<vmem>>, vector<4x8x16xbf16>
    "tpu.trace_start"() <{level = 10 : i32, message = "bqd,bds->bqs"}> : () -> ()
    %cst = arith.constant dense<0.000000e+00> : vector<4x8x8xf32>
    %8 = tpu.matmul %5, %6, %cst {dimension_numbers = #tpu.dot_dimension_numbers<[2], [1], [1], [2], [0, 0, 0, 1, 1, 2], [0], [0]>} : vector<4x8x16xbf16>, vector<4x16x8xbf16>, vector<4x8x8xf32> -> vector<4x8x8xf32>
    "tpu.trace_stop"() : () -> ()
    %c0_9 = arith.constant 0 : index
    %c0_10 = arith.constant 0 : index
    %c0_11 = arith.constant 0 : index
    %9 = vector.load %arg6[%c0_9, %c0_10, %c0_11] : memref<4x8x8xf32, #tpu.memory_space<vmem>>, vector<4x8x8xf32>
    %10 = arith.addf %8, %9 : vector<4x8x8xf32>
    %c0_12 = arith.constant 0 : index
    %c0_13 = arith.constant 0 : index
    %11 = vector.load %arg7[%c0_12, %c0_13] : memref<8x8xf32, #tpu.memory_space<vmem>>, vector<8x8xf32>
    %12 = vector.shape_cast %11 : vector<8x8xf32> to vector<1x8x8xf32>
    %13 = vector.broadcast %12 : vector<1x8x8xf32> to vector<4x8x8xf32>
    %14 = arith.addf %10, %13 : vector<4x8x8xf32>
    %c0_14 = arith.constant 0 : index
    %c0_15 = arith.constant 0 : index
    %c0_16 = arith.constant 0 : index
    %15 = vector.load %arg8[%c0_14, %c0_15, %c0_16] : memref<4x1x8xf32, #tpu.memory_space<vmem>>, vector<4x1x8xf32>
    %16 = vector.broadcast %15 : vector<4x1x8xf32> to vector<4x8x8xf32>
    %17 = arith.addf %14, %16 : vector<4x8x8xf32>
    %c0_17 = arith.constant 0 : index
    %c0_18 = arith.constant 0 : index
    %c0_19 = arith.constant 0 : index
    %18 = vector.load %arg11[%c0_17, %c0_18, %c0_19] : memref<4x8x8xf32, #tpu.memory_space<vmem>>, vector<4x8x8xf32>
    tpu.vector_store %arg11[%c0_17, %c0_18, %c0_19], %17 {strides = array<i32>} : memref<4x8x8xf32, #tpu.memory_space<vmem>>, vector<4x8x8xf32>,
    %cst_20 = arith.constant dense<0xFF800000> : vector<4x8xf32>
    %19 = vector.multi_reduction <maximumf>, %17, %cst_20 [2] : vector<4x8x8xf32> to vector<4x8xf32>
    %20 = vector.shape_cast %19 : vector<4x8xf32> to vector<4x8x1xf32>
    %21 = vector.broadcast %20 : vector<4x8x1xf32> to vector<4x8x8xf32>
    %22 = arith.subf %17, %21 : vector<4x8x8xf32>
    %23 = math.exp %22 : vector<4x8x8xf32>
    %cst_21 = arith.constant dense<0.000000e+00> : vector<4x8xf32>
    %24 = vector.multi_reduction <add>, %23, %cst_21 [2] : vector<4x8x8xf32> to vector<4x8xf32>
    %25 = vector.shape_cast %24 : vector<4x8xf32> to vector<4x8x1xf32>
    %26 = tpu.reciprocal %25 {approx = true} : vector<4x8x1xf32> -> vector<4x8x1xf32>
    %27 = vector.broadcast %26 : vector<4x8x1xf32> to vector<4x8x8xf32>
    %28 = arith.mulf %23, %27 : vector<4x8x8xf32>
    %29 = arith.truncf %28 : vector<4x8x8xf32> to vector<4x8x8xbf16>
    %c0_22 = arith.constant 0 : index
    %c0_23 = arith.constant 0 : index
    %c0_24 = arith.constant 0 : index
    %30 = vector.load %arg10[%c0_22, %c0_23, %c0_24] : memref<4x8x8xf32, #tpu.memory_space<vmem>>, vector<4x8x8xf32>
    tpu.vector_store %arg10[%c0_22, %c0_23, %c0_24], %28 {strides = array<i32>} : memref<4x8x8xf32, #tpu.memory_space<vmem>>, vector<4x8x8xf32>,
    %31 = vector.extract_strided_slice %29 {offsets = [0, 0, 0], sizes = [1, 8, 8], strides = [1, 1, 1]} : vector<4x8x8xbf16> to vector<1x8x8xbf16>
    %32 = vector.shape_cast %31 : vector<1x8x8xbf16> to vector<8x8xbf16>
    %33 = vector.extract_strided_slice %7 {offsets = [0, 0, 0], sizes = [1, 8, 16], strides = [1, 1, 1]} : vector<4x8x16xbf16> to vector<1x8x16xbf16>
    %34 = vector.shape_cast %33 : vector<1x8x16xbf16> to vector<8x16xbf16>
    %cst_25 = arith.constant dense<0.000000e+00> : vector<8x16xf32>
    %35 = tpu.matmul %32, %34, %cst_25 {dimension_numbers = #tpu.dot_dimension_numbers<[1], [0], [0], [1], [0, 0, 1, 1], [], []>} : vector<8x8xbf16>, vector<8x16xbf16>, vector<8x16xf32> -> vector<8x16xf32>
    %c0_26 = arith.constant 0 : index
    %c0_27 = arith.constant 0 : index
    %c0_28 = arith.constant 0 : index
    %36 = vector.load %arg9[%c0_26, %c0_27, %c0_28] : memref<1x8x64xf32, #tpu.memory_space<vmem>>, vector<1x8x16xf32>
    %37 = vector.shape_cast %36 : vector<1x8x16xf32> to vector<8x16xf32>
    %38 = vector.shape_cast %35 : vector<8x16xf32> to vector<1x8x16xf32>
    tpu.vector_store %arg9[%c0_26, %c0_27, %c0_28], %38 {strides = array<i32>} : memref<1x8x64xf32, #tpu.memory_space<vmem>>, vector<1x8x16xf32>,
    %39 = vector.extract_strided_slice %29 {offsets = [1, 0, 0], sizes = [1, 8, 8], strides = [1, 1, 1]} : vector<4x8x8xbf16> to vector<1x8x8xbf16>
    %40 = vector.shape_cast %39 : vector<1x8x8xbf16> to vector<8x8xbf16>
    %41 = vector.extract_strided_slice %7 {offsets = [1, 0, 0], sizes = [1, 8, 16], strides = [1, 1, 1]} : vector<4x8x16xbf16> to vector<1x8x16xbf16>
    %42 = vector.shape_cast %41 : vector<1x8x16xbf16> to vector<8x16xbf16>
    %cst_29 = arith.constant dense<0.000000e+00> : vector<8x16xf32>
    %43 = tpu.matmul %40, %42, %cst_29 {dimension_numbers = #tpu.dot_dimension_numbers<[1], [0], [0], [1], [0, 0, 1, 1], [], []>} : vector<8x8xbf16>, vector<8x16xbf16>, vector<8x16xf32> -> vector<8x16xf32>
    %c0_30 = arith.constant 0 : index
    %c0_31 = arith.constant 0 : index
    %c16 = arith.constant 16 : index
    %44 = vector.load %arg9[%c0_30, %c0_31, %c16] : memref<1x8x64xf32, #tpu.memory_space<vmem>>, vector<1x8x16xf32>
    %45 = vector.shape_cast %44 : vector<1x8x16xf32> to vector<8x16xf32>
    %46 = vector.shape_cast %43 : vector<8x16xf32> to vector<1x8x16xf32>
    tpu.vector_store %arg9[%c0_30, %c0_31, %c16], %46 {strides = array<i32>} : memref<1x8x64xf32, #tpu.memory_space<vmem>>, vector<1x8x16xf32>,
    %47 = vector.extract_strided_slice %29 {offsets = [2, 0, 0], sizes = [1, 8, 8], strides = [1, 1, 1]} : vector<4x8x8xbf16> to vector<1x8x8xbf16>
    %48 = vector.shape_cast %47 : vector<1x8x8xbf16> to vector<8x8xbf16>
    %49 = vector.extract_strided_slice %7 {offsets = [2, 0, 0], sizes = [1, 8, 16], strides = [1, 1, 1]} : vector<4x8x16xbf16> to vector<1x8x16xbf16>
    %50 = vector.shape_cast %49 : vector<1x8x16xbf16> to vector<8x16xbf16>
    %cst_32 = arith.constant dense<0.000000e+00> : vector<8x16xf32>
    %51 = tpu.matmul %48, %50, %cst_32 {dimension_numbers = #tpu.dot_dimension_numbers<[1], [0], [0], [1], [0, 0, 1, 1], [], []>} : vector<8x8xbf16>, vector<8x16xbf16>, vector<8x16xf32> -> vector<8x16xf32>
    %c0_33 = arith.constant 0 : index
    %c0_34 = arith.constant 0 : index
    %c32 = arith.constant 32 : index
    %52 = vector.load %arg9[%c0_33, %c0_34, %c32] : memref<1x8x64xf32, #tpu.memory_space<vmem>>, vector<1x8x16xf32>
    %53 = vector.shape_cast %52 : vector<1x8x16xf32> to vector<8x16xf32>
    %54 = vector.shape_cast %51 : vector<8x16xf32> to vector<1x8x16xf32>
    tpu.vector_store %arg9[%c0_33, %c0_34, %c32], %54 {strides = array<i32>} : memref<1x8x64xf32, #tpu.memory_space<vmem>>, vector<1x8x16xf32>,
    %55 = vector.extract_strided_slice %29 {offsets = [3, 0, 0], sizes = [1, 8, 8], strides = [1, 1, 1]} : vector<4x8x8xbf16> to vector<1x8x8xbf16>
    %56 = vector.shape_cast %55 : vector<1x8x8xbf16> to vector<8x8xbf16>
    %57 = vector.extract_strided_slice %7 {offsets = [3, 0, 0], sizes = [1, 8, 16], strides = [1, 1, 1]} : vector<4x8x16xbf16> to vector<1x8x16xbf16>
    %58 = vector.shape_cast %57 : vector<1x8x16xbf16> to vector<8x16xbf16>
    %cst_35 = arith.constant dense<0.000000e+00> : vector<8x16xf32>
    %59 = tpu.matmul %56, %58, %cst_35 {dimension_numbers = #tpu.dot_dimension_numbers<[1], [0], [0], [1], [0, 0, 1, 1], [], []>} : vector<8x8xbf16>, vector<8x16xbf16>, vector<8x16xf32> -> vector<8x16xf32>
    %c0_36 = arith.constant 0 : index
    %c0_37 = arith.constant 0 : index
    %c48 = arith.constant 48 : index
    %60 = vector.load %arg9[%c0_36, %c0_37, %c48] : memref<1x8x64xf32, #tpu.memory_space<vmem>>, vector<1x8x16xf32>
    %61 = vector.shape_cast %60 : vector<1x8x16xf32> to vector<8x16xf32>
    %62 = vector.shape_cast %59 : vector<8x16xf32> to vector<1x8x16xf32>
    tpu.vector_store %arg9[%c0_36, %c0_37, %c48], %62 {strides = array<i32>} : memref<1x8x64xf32, #tpu.memory_space<vmem>>, vector<1x8x16xf32>,
    return
  }
  func.func @transform_0(%arg0: i32, %arg1: i32, %arg2: memref<1xf32, #tpu.memory_space<smem>>) -> (i32, i32, i32) {
    %c0_i32 = arith.constant 0 : i32
    %c0_i32_0 = arith.constant 0 : i32
    return %arg0, %arg1, %c0_i32 : i32, i32, i32
  }
  func.func @transform_1(%arg0: i32, %arg1: i32, %arg2: memref<1xf32, #tpu.memory_space<smem>>) -> (i32, i32, i32) {
    %c0_i32 = arith.constant 0 : i32
    %c0_i32_0 = arith.constant 0 : i32
    %c0_i32_1 = arith.constant 0 : i32
    return %arg0, %c0_i32, %c0_i32_0 : i32, i32, i32
  }
  func.func @transform_2(%arg0: i32, %arg1: i32, %arg2: memref<1xf32, #tpu.memory_space<smem>>) -> (i32, i32, i32) {
    %c0_i32 = arith.constant 0 : i32
    %c0_i32_0 = arith.constant 0 : i32
    %c0_i32_1 = arith.constant 0 : i32
    return %arg0, %c0_i32, %c0_i32_0 : i32, i32, i32
  }
  func.func @transform_3(%arg0: i32, %arg1: i32, %arg2: memref<1xf32, #tpu.memory_space<smem>>) -> (i32, i32, i32) {
    %c0_i32 = arith.constant 0 : i32
    %c0_i32_0 = arith.constant 0 : i32
    return %arg0, %arg1, %c0_i32 : i32, i32, i32
  }
  func.func @transform_4(%arg0: i32, %arg1: i32, %arg2: memref<1xf32, #tpu.memory_space<smem>>) -> (i32, i32) {
    %c0_i32 = arith.constant 0 : i32
    %c0_i32_0 = arith.constant 0 : i32
    return %arg1, %c0_i32 : i32, i32
  }
  func.func @transform_5(%arg0: i32, %arg1: i32, %arg2: memref<1xf32, #tpu.memory_space<smem>>) -> (i32, i32, i32) {
    %c0_i32 = arith.constant 0 : i32
    %c0_i32_0 = arith.constant 0 : i32
    %c0_i32_1 = arith.constant 0 : i32
    return %arg0, %c0_i32, %c0_i32_0 : i32, i32, i32
  }
  func.func @transform_6(%arg0: i32, %arg1: i32, %arg2: memref<1xf32, #tpu.memory_space<smem>>) -> (i32, i32, i32) {
    %c0_i32 = arith.constant 0 : i32
    %c0_i32_0 = arith.constant 0 : i32
    return %arg0, %arg1, %c0_i32 : i32, i32, i32
  }
  func.func @transform_7(%arg0: i32, %arg1: i32, %arg2: memref<1xf32, #tpu.memory_space<smem>>) -> (i32, i32, i32) {
    %c0_i32 = arith.constant 0 : i32
    %c0_i32_0 = arith.constant 0 : i32
    return %arg0, %arg1, %c0_i32 : i32, i32, i32
  }
  func.func @transform_8(%arg0: i32, %arg1: i32, %arg2: memref<1xf32, #tpu.memory_space<smem>>) -> (i32, i32, i32) {
    %c0_i32 = arith.constant 0 : i32
    %c0_i32_0 = arith.constant 0 : i32
    return %arg0, %arg1, %c0_i32 : i32, i32, i32
  }
}

</mosaic_0001>

<llo_original>
// kernel: tpu_custom_call.1
$region0: #{tpu_custom_call.1}
  #allocation0 [shape = 'u32[]', space=smem, size = 0x4, offset = 0x4, fixed_abs, tag = 'smem constant byte address 0x4 - core index']
  #allocation1 [shape = 'u32[72,128]{1,0:T(1,128)}', space=vmem, size = 0x9000, scoped, tag = 'internal scratch']
  #allocation2 [shape = 's32[1]{0}', space=sflag, size = 0x4, scoped, tag = 'scoped memory for tpu_custom_call.1']
  #allocation3 [shape = 'f32[1]{0:T(128)S(6)}', space=smem, size = 0x200, scoped, tag = 'prefetched SMEM operand 0']
  %s0 = inlined_call_operand.<no memory space> [shape: f32[1], index: 0, kind: input, shape index: {}]
  %s1 = inlined_call_operand.vmem [shape: bf16[8,8,16], index: 1, kind: input, shape index: {}]
  %s2 = inlined_call_operand.vmem [shape: bf16[8,16,8], index: 2, kind: input, shape index: {}]
  %s3 = inlined_call_operand.hbm [shape: bf16[8,8,16], index: 3, kind: input, shape index: {}]
  %s4 = inlined_call_operand.vmem [shape: f32[8,8,8], index: 4, kind: input, shape index: {}]
  %s5 = inlined_call_operand.hbm [shape: f32[8,8], index: 5, kind: input, shape index: {}]
  %s6 = inlined_call_operand.hbm [shape: f32[8,1,8], index: 6, kind: input, shape index: {}]
  %s7 = inlined_call_operand.hbm [shape: f32[2,8,64], index: 7, kind: output, shape index: {0}]
  %s8 = inlined_call_operand.hbm [shape: f32[8,8,8], index: 8, kind: output, shape index: {1}]
  %s9 = inlined_call_operand.hbm [shape: f32[8,8,8], index: 9, kind: output, shape index: {2}]
  %10 = xla_tuple %s7, %s8, %s9
  %s11 = sld [smem:[#allocation0]]
  $region85: #{tpu_custom_call.1} parent=0
    _
  %s13 = ssub.s32 1, %s11
  %s14 = scalar_select 0, %s13, %s11
  %15 = sst [smem:[#allocation3]] %s0
  $region1: #{tpu_custom_call.1} parent=0
    #allocation4 [shape = 'u8[16384]{0}', space=vmem, size = 0x4000, scoped, tag = 'input window, operand 3']
    #allocation5 [shape = 's32[2]{0}', space=sflag, size = 0x8, scoped, tag = 'scoped memory for tpu_custom_call.1']
    #allocation6 [shape = 's32[2]{0}', space=sflag, size = 0x8, scoped, tag = 'scoped memory for tpu_custom_call.1']
    #allocation7 [shape = 'u8[4096]{0}', space=vmem, size = 0x1000, scoped, tag = 'input window, operand 5, single buffered']
    #allocation8 [shape = 's32[1]{0}', space=sflag, size = 0x4, scoped, tag = 'scoped memory for tpu_custom_call.1']
    #allocation9 [shape = 'u8[4096]{0}', space=vmem, size = 0x1000, scoped, tag = 'input window, operand 6']
    #allocation10 [shape = 'u8[8192]{0}', space=vmem, size = 0x2000, scoped, tag = 'output window, operand 0']
    #allocation11 [shape = 'u8[32768]{0}', space=vmem, size = 0x8000, scoped, tag = 'output window, operand 1']
    #allocation12 [shape = 's32[2]{0}', space=sflag, size = 0x8, scoped, tag = 'scoped memory for tpu_custom_call.1']
    #allocation13 [shape = 'u8[32768]{0}', space=vmem, size = 0x8000, scoped, tag = 'output window, operand 2']
    %16 = vsyncpa [#allocation5], 0
    %s17 = scalar_lea.sflag [#allocation5], 1
    %18 = vsyncpa %s17, 0
    %19 = vsyncpa [#allocation8], 0
    %20 = vsyncpa [#allocation6], 0
    %s21 = scalar_lea.sflag [#allocation6], 1
    %22 = vsyncpa %s21, 0
    %23 = vsyncpa [#allocation12], 0
    %s24 = scalar_lea.sflag [#allocation12], 1
    %25 = vsyncpa %s24, 0
    loop: start=0, step=1, limit=4
    $region2: #{tpu_custom_call.1} parent=1 // loop_pre_header
      _
    $region3: #{tpu_custom_call.1} parent=1 // loop_header
      %s27 = sphi 0, %s31
      %p28 = scmp.ge.s32.totalorder %s27, 4
      %s34 = sphi 0, %s46
      %s35 = sphi 0, %s42
      %s36 = sphi 0, %s34
      %s37 = sphi 0, %s35
      %s38 = sphi 0, %s36
      %s39 = sphi 0, %s37
      %s51 = sphi 0, %s53
      %s54 = sphi 0, %s51
      %s55 = sphi 0, %s54
      %s71 = sphi 0, %s55
      %s77 = sphi 0, %s79
      %s80 = sphi 0, %s77
      %s81 = sphi 0, %s80
      %s97 = sphi 0, %s81
      %s103 = sphi 0, %s105
      %s106 = sphi 0, %s103
      %s107 = sphi 0, %s106
      %s123 = sphi 0, %s107
      %s131 = sphi 0, %s133
      %s134 = sphi 0, %s131
      %s135 = sphi 0, %s134
      %s151 = sphi 0, %s135
      %s157 = sphi 0, %s159
      %s160 = sphi 0, %s157
      %s161 = sphi 0, %s160
      %s177 = sphi 0, %s161
      %s183 = sphi 0, %s185
      %s186 = sphi 0, %s183
      %s187 = sphi 0, %s186
      %s203 = sphi 0, %s187
      %s211 = sphi 0, %s213
      %s214 = sphi 0, %s211
      %s215 = sphi 0, %s214
      %s231 = sphi 0, %s215
      %s239 = sphi 0, %s241
      %s242 = sphi 0, %s239
      %s243 = sphi 0, %s242
      %s259 = sphi 0, %s243
      %s267 = sphi 0, %s269
      %s270 = sphi 0, %s267
      %s271 = sphi 0, %s270
      %s287 = sphi 0, %s271
    $region4: #{tpu_custom_call.1} parent=1 // loop_header_branch
      %30 = sbr.rel (%p28) target = $region8
    $region5: #{tpu_custom_call.1} parent=1 // loop_body
      %s32 = ssub.s32 %s27, 1
      %s33 = ssub.s32 %s27, 2
      %s40 = sadd.s32 1, %s35
      %p41 = scmp.ge.s32.totalorder %s40, 1
      %s42 = scalar_select %p41, 0, %s40
      %s43 = sadd.s32 1, %s34
      %s44 = scalar_select %p41, %s43, %s34
      %p45 = scmp.ge.s32.totalorder %s44, 2
      %s46 = scalar_select %p45, 0, %s44
      %s47 = ssub.s32 %s34, %s46
      %s48 = ssub.s32 %s35, %s42
      %s49 = sor.u32 %s47, %s48
      %p50 = scmp.eq.s32.totalorder %s49, 0
      %s52 = sadd.s32 %s51, 1
      %s53 = scalar_select %p50, %s51, %s52
      %p56 = pneg %p50
      %p57 = scmp.eq.s32.totalorder %s27, 1
      %p58 = por %p56, %p57
      %p59 = scmp.ne.s32.totalorder %s51, %s54
      %p60 = scmp.eq.s32.totalorder %s27, 0
      %p61 = por %p59, %p60
      %p62 = scmp.ne.s32.totalorder %s51, %s54
      %p63 = scmp.eq.s32.totalorder %s32, 1
      %p64 = por %p62, %p63
      %p65 = scmp.ne.s32.totalorder %s54, %s55
      %p66 = scmp.eq.s32.totalorder %s32, 0
      %p67 = por %p65, %p66
      %p68 = scmp.ne.s32.totalorder %s54, %s55
      %p69 = scmp.eq.s32.totalorder %s33, 1
      %p70 = por %p68, %p69
      %p72 = scmp.ne.s32.totalorder %s55, %s71
      %p73 = scmp.eq.s32.totalorder %s33, 0
      %p74 = por %p72, %p73
      %s75 = ssub.s32 %s34, %s46
      %p76 = scmp.eq.s32.totalorder %s75, 0
      %s78 = sadd.s32 %s77, 1
      %s79 = scalar_select %p76, %s77, %s78
      %p82 = pneg %p76
      %p83 = scmp.eq.s32.totalorder %s27, 1
      %p84 = por %p82, %p83
      %p85 = scmp.ne.s32.totalorder %s77, %s80
      %p86 = scmp.eq.s32.totalorder %s27, 0
      %p87 = por %p85, %p86
      %p88 = scmp.ne.s32.totalorder %s77, %s80
      %p89 = scmp.eq.s32.totalorder %s32, 1
      %p90 = por %p88, %p89
      %p91 = scmp.ne.s32.totalorder %s80, %s81
      %p92 = scmp.eq.s32.totalorder %s32, 0
      %p93 = por %p91, %p92
      %p94 = scmp.ne.s32.totalorder %s80, %s81
      %p95 = scmp.eq.s32.totalorder %s33, 1
      %p96 = por %p94, %p95
      %p98 = scmp.ne.s32.totalorder %s81, %s97
      %p99 = scmp.eq.s32.totalorder %s33, 0
      %p100 = por %p98, %p99
      %s101 = ssub.s32 %s34, %s46
      %p102 = scmp.eq.s32.totalorder %s101, 0
      %s104 = sadd.s32 %s103, 1
      %s105 = scalar_select %p102, %s103, %s104
      %p108 = pneg %p102
      %p109 = scmp.eq.s32.totalorder %s27, 1
      %p110 = por %p108, %p109
      %p111 = scmp.ne.s32.totalorder %s103, %s106
      %p112 = scmp.eq.s32.totalorder %s27, 0
      %p113 = por %p111, %p112
      %p114 = scmp.ne.s32.totalorder %s103, %s106
      %p115 = scmp.eq.s32.totalorder %s32, 1
      %p116 = por %p114, %p115
      %p117 = scmp.ne.s32.totalorder %s106, %s107
      %p118 = scmp.eq.s32.totalorder %s32, 0
      %p119 = por %p117, %p118
      %p120 = scmp.ne.s32.totalorder %s106, %s107
      %p121 = scmp.eq.s32.totalorder %s33, 1
      %p122 = por %p120, %p121
      %p124 = scmp.ne.s32.totalorder %s107, %s123
      %p125 = scmp.eq.s32.totalorder %s33, 0
      %p126 = por %p124, %p125
      %s127 = ssub.s32 %s34, %s46
      %s128 = ssub.s32 %s35, %s42
      %s129 = sor.u32 %s127, %s128
      %p130 = scmp.eq.s32.totalorder %s129, 0
      %s132 = sadd.s32 %s131, 1
      %s133 = scalar_select %p130, %s131, %s132
      %p136 = pneg %p130
      %p137 = scmp.eq.s32.totalorder %s27, 1
      %p138 = por %p136, %p137
      %p139 = scmp.ne.s32.totalorder %s131, %s134
      %p140 = scmp.eq.s32.totalorder %s27, 0
      %p141 = por %p139, %p140
      %p142 = scmp.ne.s32.totalorder %s131, %s134
      %p143 = scmp.eq.s32.totalorder %s32, 1
      %p144 = por %p142, %p143
      %p145 = scmp.ne.s32.totalorder %s134, %s135
      %p146 = scmp.eq.s32.totalorder %s32, 0
      %p147 = por %p145, %p146
      %p148 = scmp.ne.s32.totalorder %s134, %s135
      %p149 = scmp.eq.s32.totalorder %s33, 1
      %p150 = por %p148, %p149
      %p152 = scmp.ne.s32.totalorder %s135, %s151
      %p153 = scmp.eq.s32.totalorder %s33, 0
      %p154 = por %p152, %p153
      %s155 = ssub.s32 %s35, %s42
      %p156 = scmp.eq.s32.totalorder %s155, 0
      %s158 = sadd.s32 %s157, 1
      %s159 = scalar_select %p156, %s157, %s158
      %p162 = pneg %p156
      %p163 = scmp.eq.s32.totalorder %s27, 1
      %p164 = por %p162, %p163
      %p165 = scmp.ne.s32.totalorder %s157, %s160
      %p166 = scmp.eq.s32.totalorder %s27, 0
      %p167 = por %p165, %p166
      %p168 = scmp.ne.s32.totalorder %s157, %s160
      %p169 = scmp.eq.s32.totalorder %s32, 1
      %p170 = por %p168, %p169
      %p171 = scmp.ne.s32.totalorder %s160, %s161
      %p172 = scmp.eq.s32.totalorder %s32, 0
      %p173 = por %p171, %p172
      %p174 = scmp.ne.s32.totalorder %s160, %s161
      %p175 = scmp.eq.s32.totalorder %s33, 1
      %p176 = por %p174, %p175
      %p178 = scmp.ne.s32.totalorder %s161, %s177
      %p179 = scmp.eq.s32.totalorder %s33, 0
      %p180 = por %p178, %p179
      %s181 = ssub.s32 %s34, %s46
      %p182 = scmp.eq.s32.totalorder %s181, 0
      %s184 = sadd.s32 %s183, 1
      %s185 = scalar_select %p182, %s183, %s184
      %p188 = pneg %p182
      %p189 = scmp.eq.s32.totalorder %s27, 1
      %p190 = por %p188, %p189
      %p191 = scmp.ne.s32.totalorder %s183, %s186
      %p192 = scmp.eq.s32.totalorder %s27, 0
      %p193 = por %p191, %p192
      %p194 = scmp.ne.s32.totalorder %s183, %s186
      %p195 = scmp.eq.s32.totalorder %s32, 1
      %p196 = por %p194, %p195
      %p197 = scmp.ne.s32.totalorder %s186, %s187
      %p198 = scmp.eq.s32.totalorder %s32, 0
      %p199 = por %p197, %p198
      %p200 = scmp.ne.s32.totalorder %s186, %s187
      %p201 = scmp.eq.s32.totalorder %s33, 1
      %p202 = por %p200, %p201
      %p204 = scmp.ne.s32.totalorder %s187, %s203
      %p205 = scmp.eq.s32.totalorder %s33, 0
      %p206 = por %p204, %p205
      %s207 = ssub.s32 %s34, %s46
      %s208 = ssub.s32 %s35, %s42
      %s209 = sor.u32 %s207, %s208
      %p210 = scmp.eq.s32.totalorder %s209, 0
      %s212 = sadd.s32 %s211, 1
      %s213 = scalar_select %p210, %s211, %s212
      %p216 = pneg %p210
      %p217 = scmp.eq.s32.totalorder %s27, 1
      %p218 = por %p216, %p217
      %p219 = scmp.ne.s32.totalorder %s211, %s214
      %p220 = scmp.eq.s32.totalorder %s27, 0
      %p221 = por %p219, %p220
      %p222 = scmp.ne.s32.totalorder %s211, %s214
      %p223 = scmp.eq.s32.totalorder %s32, 1
      %p224 = por %p222, %p223
      %p225 = scmp.ne.s32.totalorder %s214, %s215
      %p226 = scmp.eq.s32.totalorder %s32, 0
      %p227 = por %p225, %p226
      %p228 = scmp.ne.s32.totalorder %s214, %s215
      %p229 = scmp.eq.s32.totalorder %s33, 1
      %p230 = por %p228, %p229
      %p232 = scmp.ne.s32.totalorder %s215, %s231
      %p233 = scmp.eq.s32.totalorder %s33, 0
      %p234 = por %p232, %p233
      %s235 = ssub.s32 %s34, %s46
      %s236 = ssub.s32 %s35, %s42
      %s237 = sor.u32 %s235, %s236
      %p238 = scmp.eq.s32.totalorder %s237, 0
      %s240 = sadd.s32 %s239, 1
      %s241 = scalar_select %p238, %s239, %s240
      %p244 = pneg %p238
      %p245 = scmp.eq.s32.totalorder %s27, 1
      %p246 = por %p244, %p245
      %p247 = scmp.ne.s32.totalorder %s239, %s242
      %p248 = scmp.eq.s32.totalorder %s27, 0
      %p249 = por %p247, %p248
      %p250 = scmp.ne.s32.totalorder %s239, %s242
      %p251 = scmp.eq.s32.totalorder %s32, 1
      %p252 = por %p250, %p251
      %p253 = scmp.ne.s32.totalorder %s242, %s243
      %p254 = scmp.eq.s32.totalorder %s32, 0
      %p255 = por %p253, %p254
      %p256 = scmp.ne.s32.totalorder %s242, %s243
      %p257 = scmp.eq.s32.totalorder %s33, 1
      %p258 = por %p256, %p257
      %p260 = scmp.ne.s32.totalorder %s243, %s259
      %p261 = scmp.eq.s32.totalorder %s33, 0
      %p262 = por %p260, %p261
      %s263 = ssub.s32 %s34, %s46
      %s264 = ssub.s32 %s35, %s42
      %s265 = sor.u32 %s263, %s264
      %p266 = scmp.eq.s32.totalorder %s265, 0
      %s268 = sadd.s32 %s267, 1
      %s269 = scalar_select %p266, %s267, %s268
      %p272 = pneg %p266
      %p273 = scmp.eq.s32.totalorder %s27, 1
      %p274 = por %p272, %p273
      %p275 = scmp.ne.s32.totalorder %s267, %s270
      %p276 = scmp.eq.s32.totalorder %s27, 0
      %p277 = por %p275, %p276
      %p278 = scmp.ne.s32.totalorder %s267, %s270
      %p279 = scmp.eq.s32.totalorder %s32, 1
      %p280 = por %p278, %p279
      %p281 = scmp.ne.s32.totalorder %s270, %s271
      %p282 = scmp.eq.s32.totalorder %s32, 0
      %p283 = por %p281, %p282
      %p284 = scmp.ne.s32.totalorder %s270, %s271
      %p285 = scmp.eq.s32.totalorder %s33, 1
      %p286 = por %p284, %p285
      %p288 = scmp.ne.s32.totalorder %s271, %s287
      %p289 = scmp.eq.s32.totalorder %s33, 0
      %p290 = por %p288, %p289
      %p291 = scmp.le.s32.totalorder 1, %s27
      %p292 = scmp.lt.s32.totalorder %s27, 3
      %p293 = pnand %p291, %p292
      %p294 = pneg %p293
      // Predicated region
      $region9: #{tpu_custom_call.1} parent=5 // pred_check
        _
      $region10: #{tpu_custom_call.1} parent=5 // pred_check_branch
        %296 = sbr.rel (%p293) target = $region12
      $region11: #{tpu_custom_call.1} parent=5 // pred_region
        %s297 = ssub.s32 %s27, 1
        // Predicated region
        $region13: #{tpu_custom_call.1} parent=11 // pred_check
          %p298 = pneg %p173
        $region14: #{tpu_custom_call.1} parent=11 // pred_check_branch
          %300 = sbr.rel (%p298) target = $region16
        $region15: #{tpu_custom_call.1} parent=11 // pred_region
          %302 = vsyncadd [#allocation8], 0
          %s303 = smul.addr %s37, 8
          %s304 = scalar_lea.hbm %s5, %s303
          %s306 = sshll.u32 %s304, 4
          %s307 = int_to_ptr.hbm [resolvable:$true] %s306
          %s308 = sshll.u32 [#allocation7], 4
          %s309 = int_to_ptr.vmem [resolvable:$true] %s308
          %311 = dma.hbm_to_vmem [thread:$0]  %s307, 128, %s309, [#allocation8]
        $region16: #{tpu_custom_call.1} parent=11 // pred_fallthru
          _
      $region12: #{tpu_custom_call.1} parent=5 // pred_fallthru
        _
      %p312 = scmp.lt.s32.totalorder %s27, 2
      // Predicated region
      $region17: #{tpu_custom_call.1} parent=5 // pred_check
        %p313 = pneg %p312
      $region18: #{tpu_custom_call.1} parent=5 // pred_check_branch
        %315 = sbr.rel (%p313) target = $region20
      $region19: #{tpu_custom_call.1} parent=5 // pred_region
        // Predicated region
        $region21: #{tpu_custom_call.1} parent=19 // pred_check
          %p316 = pneg %p61
        $region22: #{tpu_custom_call.1} parent=19 // pred_check_branch
          %318 = sbr.rel (%p316) target = $region24
        $region23: #{tpu_custom_call.1} parent=19 // pred_region
          %s319 = smul.u32 4, %s34
          %p320 = scmp.lt.s32.totalorder %s319, 7
          %s321 = scalar_select %p320, %s319, 7
          %p322 = scmp.lt.s32.totalorder %s35, 0
          %s323 = scalar_select %p322, %s35, 0
          %s324 = sadd.s32 %s323, %s321
          %s325 = smul.addr %s324, 4
          %s326 = scalar_lea.vmem %s1, %s325
          %s327 = smul.u32 4, %s34
        $region24: #{tpu_custom_call.1} parent=19 // pred_fallthru
          _
        // Predicated region
        $region25: #{tpu_custom_call.1} parent=19 // pred_check
          %p328 = pneg %p87
        $region26: #{tpu_custom_call.1} parent=19 // pred_check_branch
          %330 = sbr.rel (%p328) target = $region28
        $region27: #{tpu_custom_call.1} parent=19 // pred_region
          %s331 = smul.u32 4, %s34
          %p332 = scmp.lt.s32.totalorder %s331, 7
          %s333 = scalar_select %p332, %s331, 7
          %s334 = smul.addr %s333, 2
          %s335 = smul.addr %s334, 4
          %s336 = scalar_lea.vmem %s2, %s335
          %s337 = smul.u32 4, %s34
        $region28: #{tpu_custom_call.1} parent=19 // pred_fallthru
          _
        // Predicated region
        $region29: #{tpu_custom_call.1} parent=19 // pred_check
          %p338 = pneg %p113
        $region30: #{tpu_custom_call.1} parent=19 // pred_check_branch
          %340 = sbr.rel (%p338) target = $region32
        $region31: #{tpu_custom_call.1} parent=19 // pred_region
          %s341 = sand.u32 %s27, 1
          %s342 = scalar_lea.sflag [#allocation5], %s341
          %s343 = sand.u32 %s103, 1
          %s344 = smul.addr %s343, 16
          %s345 = scalar_lea.vmem [#allocation4], %s344
          %s346 = smul.u32 4, %s34
          %348 = vsyncadd %s342, 0
          %s349 = smul.addr %s346, 4
          %s350 = scalar_lea.hbm %s3, %s349
          %s351 = sshll.u32 %s350, 4
          %s352 = int_to_ptr.hbm [resolvable:$true] %s351
          %s353 = sshll.u32 %s345, 4
          %s354 = int_to_ptr.vmem [resolvable:$true] %s353
          %359 = dma.hbm_to_vmem [thread:$0]  %s352, 256, %s354, %s342, 64, 64, 4
        $region32: #{tpu_custom_call.1} parent=19 // pred_fallthru
          _
        // Predicated region
        $region33: #{tpu_custom_call.1} parent=19 // pred_check
          %p360 = pneg %p141
        $region34: #{tpu_custom_call.1} parent=19 // pred_check_branch
          %362 = sbr.rel (%p360) target = $region36
        $region35: #{tpu_custom_call.1} parent=19 // pred_region
          %s363 = smul.u32 4, %s34
          %p364 = scmp.lt.s32.totalorder %s363, 7
          %s365 = scalar_select %p364, %s363, 7
          %p366 = scmp.lt.s32.totalorder %s35, 0
          %s367 = scalar_select %p366, %s35, 0
          %s368 = sadd.s32 %s367, %s365
          %s369 = smul.addr %s368, 8
          %s370 = scalar_lea.vmem %s4, %s369
          %s371 = smul.u32 4, %s34
        $region36: #{tpu_custom_call.1} parent=19 // pred_fallthru
          _
        // Predicated region
        $region37: #{tpu_custom_call.1} parent=19 // pred_check
          %p372 = pneg %p193
        $region38: #{tpu_custom_call.1} parent=19 // pred_check_branch
          %374 = sbr.rel (%p372) target = $region40
        $region39: #{tpu_custom_call.1} parent=19 // pred_region
          %s375 = sand.u32 %s27, 1
          %s376 = scalar_lea.sflag [#allocation5], %s375
          %s377 = sand.u32 %s183, 1
          %s378 = smul.addr %s377, 4
          %s379 = scalar_lea.vmem [#allocation9], %s378
          %s380 = smul.u32 4, %s34
          %382 = vsyncadd %s376, 0
          %s383 = scalar_lea.hbm %s6, %s380
          %s384 = sshll.u32 %s383, 4
          %s385 = int_to_ptr.hbm [resolvable:$true] %s384
          %s386 = sshll.u32 %s379, 4
          %s387 = int_to_ptr.vmem [resolvable:$true] %s386
          %392 = dma.hbm_to_vmem [thread:$0]  %s385, 64, %s387, %s376, 16, 16, 1
        $region40: #{tpu_custom_call.1} parent=19 // pred_fallthru
          _
      $region20: #{tpu_custom_call.1} parent=5 // pred_fallthru
        _
      %p393 = scmp.le.s32.totalorder 1, %s27
      %p394 = scmp.lt.s32.totalorder %s27, 3
      %p395 = pnand %p393, %p394
      %p396 = pneg %p395
      // Predicated region
      $region41: #{tpu_custom_call.1} parent=5 // pred_check
        _
      $region42: #{tpu_custom_call.1} parent=5 // pred_check_branch
        %398 = sbr.rel (%p395) target = $region44
      $region43: #{tpu_custom_call.1} parent=5 // pred_region
        %s399 = ssub.s32 %s27, 1
        %s400 = sand.u32 %s32, 1
        %s401 = scalar_lea.sflag [#allocation5], %s400
        %s402 = sand.u32 %s106, 1
        %s403 = smul.addr %s402, 16
        %s404 = scalar_lea.vmem [#allocation4], %s403
        // Predicated region
        $region45: #{tpu_custom_call.1} parent=43 // pred_check
          %p405 = pneg %p119
        $region46: #{tpu_custom_call.1} parent=43 // pred_check_branch
          %407 = sbr.rel (%p405) target = $region48
        $region47: #{tpu_custom_call.1} parent=43 // pred_region
          %409 = dma.done %s401, 256
        $region48: #{tpu_custom_call.1} parent=43 // pred_fallthru
          _
        // Predicated region
        $region49: #{tpu_custom_call.1} parent=43 // pred_check
          %p410 = pneg %p173
        $region50: #{tpu_custom_call.1} parent=43 // pred_check_branch
          %412 = sbr.rel (%p410) target = $region52
        $region51: #{tpu_custom_call.1} parent=43 // pred_region
          %414 = dma.done [#allocation8], 128
        $region52: #{tpu_custom_call.1} parent=43 // pred_fallthru
          _
        %s415 = sand.u32 %s32, 1
        %s416 = scalar_lea.sflag [#allocation5], %s415
        %s417 = sand.u32 %s186, 1
        %s418 = smul.addr %s417, 4
        %s419 = scalar_lea.vmem [#allocation9], %s418
        // Predicated region
        $region53: #{tpu_custom_call.1} parent=43 // pred_check
          %p420 = pneg %p199
        $region54: #{tpu_custom_call.1} parent=43 // pred_check_branch
          %422 = sbr.rel (%p420) target = $region56
        $region55: #{tpu_custom_call.1} parent=43 // pred_region
          %424 = dma.done %s416, 64
        $region56: #{tpu_custom_call.1} parent=43 // pred_fallthru
          _
        %s425 = smul.u32 4, %s36
        %p426 = scmp.lt.s32.totalorder %s425, 7
        %s427 = scalar_select %p426, %s425, 7
        %p428 = scmp.lt.s32.totalorder %s37, 0
        %s429 = scalar_select %p428, %s37, 0
        %s430 = sadd.s32 %s429, %s427
        %s431 = smul.addr %s430, 4
        %s432 = scalar_lea.vmem %s1, %s431
        %p433 = pneg %p67
        %p434 = pneg %p64
        %s435 = smul.u32 4, %s36
        %p436 = scmp.lt.s32.totalorder %s435, 7
        %s437 = scalar_select %p436, %s435, 7
        %s438 = smul.addr %s437, 2
        %s439 = smul.addr %s438, 4
        %s440 = scalar_lea.vmem %s2, %s439
        %p441 = pneg %p93
        %p442 = pneg %p90
        %s443 = sand.u32 %s32, 1
        %s444 = scalar_lea.sflag [#allocation5], %s443
        %s445 = sand.u32 %s106, 1
        %s446 = smul.addr %s445, 16
        %s447 = scalar_lea.vmem [#allocation4], %s446
        %p448 = pneg %p119
        %p449 = pneg %p116
        %s450 = smul.u32 4, %s36
        %p451 = scmp.lt.s32.totalorder %s450, 7
        %s452 = scalar_select %p451, %s450, 7
        %p453 = scmp.lt.s32.totalorder %s37, 0
        %s454 = scalar_select %p453, %s37, 0
        %s455 = sadd.s32 %s454, %s452
        %s456 = smul.addr %s455, 8
        %s457 = scalar_lea.vmem %s4, %s456
        %p458 = pneg %p147
        %p459 = pneg %p144
        %p460 = pneg %p173
        %p461 = pneg %p170
        %s462 = sand.u32 %s32, 1
        %s463 = scalar_lea.sflag [#allocation5], %s462
        %s464 = sand.u32 %s186, 1
        %s465 = smul.addr %s464, 4
        %s466 = scalar_lea.vmem [#allocation9], %s465
        %p467 = pneg %p199
        %p468 = pneg %p196
        %p469 = pneg %p227
        %p470 = pneg %p224
        %s471 = sand.u32 %s214, 1
        %s472 = scalar_lea.sflag [#allocation6], %s471
        %s473 = sand.u32 %s214, 1
        %s474 = smul.addr %s473, 8
        %s475 = scalar_lea.vmem [#allocation10], %s474
        %p476 = pneg %p255
        %p477 = pneg %p252
        %s478 = sand.u32 %s32, 1
        %s479 = scalar_lea.sflag [#allocation12], %s478
        %s480 = sand.u32 %s242, 1
        %s481 = smul.addr %s480, 32
        %s482 = scalar_lea.vmem [#allocation11], %s481
        %p483 = pneg %p283
        %p484 = pneg %p280
        %s485 = sand.u32 %s32, 1
        %s486 = scalar_lea.sflag [#allocation12], %s485
        %s487 = sand.u32 %s270, 1
        %s488 = smul.addr %s487, 32
        %s489 = scalar_lea.vmem [#allocation13], %s488
        %s490 = smul.u32 4, %s36
        %p491 = scmp.lt.s32.totalorder %s490, 7
        %s492 = scalar_select %p491, %s490, 7
        %p493 = scmp.lt.s32.totalorder %s37, 0
        %s494 = scalar_select %p493, %s37, 0
        %s495 = sadd.s32 %s494, %s492
        %s496 = smul.addr %s495, 4
        %s497 = scalar_lea.vmem %s1, %s496
        %s498 = smul.u32 4, %s36
        %s499 = smul.u32 4, %s36
        %p500 = scmp.lt.s32.totalorder %s499, 7
        %s501 = scalar_select %p500, %s499, 7
        %s502 = smul.addr %s501, 2
        %s503 = smul.addr %s502, 4
        %s504 = scalar_lea.vmem %s2, %s503
        %s505 = smul.u32 4, %s36
        %s506 = smul.u32 4, %s36
        %s507 = smul.u32 4, %s36
        %p508 = scmp.lt.s32.totalorder %s507, 7
        %s509 = scalar_select %p508, %s507, 7
        %p510 = scmp.lt.s32.totalorder %s37, 0
        %s511 = scalar_select %p510, %s37, 0
        %s512 = sadd.s32 %s511, %s509
        %s513 = smul.addr %s512, 8
        %s514 = scalar_lea.vmem %s4, %s513
        %s515 = smul.u32 4, %s36
        %s516 = smul.u32 4, %s36
        %s517 = smul.u32 4, %s36
        %s518 = smul.u32 4, %s36
        %s520 = sld [smem:[#allocation3]]
        %v521 = vld [vmem:[%s497] sm:$0xf]
        %v522 = vld [vmem:[%s497 + $0x4] sm:$0xf]
        %v523 = vld [vmem:[%s497 + $0x8] sm:$0xf]
        %v524 = vld [vmem:[%s497 + $0xc] sm:$0xf]
        %v525 = vunpack.c.l.bf16 %v521
        %v526 = vunpack.c.l.bf16 %v522
        %v527 = vunpack.c.l.bf16 %v523
        %v528 = vunpack.c.l.bf16 %v524
        %v529 = vstv %s520
        %v530 = vmul.f32 %v525, %v529
        %v531 = vmul.f32 %v526, %v529
        %v532 = vmul.f32 %v527, %v529
        %v533 = vmul.f32 %v528, %v529
        %v534 = vpack.c.bf16 %v530, %v530
        %v535 = vpack.c.bf16 %v531, %v531
        %v536 = vpack.c.bf16 %v532, %v532
        %v537 = vpack.c.bf16 %v533, %v533
        %v538 = vld [vmem:[%s504] sm:$0xf]
        %v539 = vld [vmem:[%s504 + $0x4] sm:$0xf]
        %v540 = vld [vmem:[%s504 + $0x8] sm:$0xf]
        %v541 = vld [vmem:[%s504 + $0xc] sm:$0xf]
        %v542 = vld [vmem:[%s504 + $0x10] sm:$0xf]
        %v543 = vld [vmem:[%s504 + $0x14] sm:$0xf]
        %v544 = vld [vmem:[%s504 + $0x18] sm:$0xf]
        %v545 = vld [vmem:[%s504 + $0x1c] sm:$0xf]
        %v546 = vld [vmem:[%s404] sm:$0xf]
        %v547 = vld [vmem:[%s404 + $0x4] sm:$0xf]
        %v548 = vld [vmem:[%s404 + $0x8] sm:$0xf]
        %v549 = vld [vmem:[%s404 + $0xc] sm:$0xf]
        %v550 = vld [vmem:[%s514] sm:$0xff]
        %v551 = vld [vmem:[%s514 + $0x8] sm:$0xff]
        %v552 = vld [vmem:[%s514 + $0x10] sm:$0xff]
        %v553 = vld [vmem:[%s514 + $0x18] sm:$0xff]
        %v556 = vunpack.c.l.b16 %v538
        %v557 = vunpack.c.l.b16 %v539
        %v558 = vpack.c.b16 %v557, %v556
        %vm560 = vcmask 130048
        %v562 = vsel %vm560, %v534, 0
        %564 = vmatpush.bf16.msra.mxu0 0
        %565 = vmatpush.bf16.msra.mxu0 0
        %566 = vmatpush.bf16.msra.mxu0 0
        %567 = vmatpush.bf16.msra.mxu0 0
        %568 = vmatpush.bf16.msra.mxu0 0
        %569 = vmatpush.bf16.msra.mxu0 0
        %570 = vmatpush.bf16.msra.mxu0 0
        %571 = vmatpush.bf16.msra.mxu0 %v558
        %572 = vmatmul.bf16.gmra.mxu0 %v562
        %v573 = vpop.f32.mrf.mxu0
        %v574 = vadd.f32 %v550, %v573
        %v575 = vpop.f32.mrf.mxu0
        %576 = vdwg.mxu0
        %v579 = vunpack.c.l.b16 %v540
        %v580 = vunpack.c.l.b16 %v541
        %v581 = vpack.c.b16 %v580, %v579
        %v584 = vsel %vm560, %v535, 0
        %586 = vmatpush.bf16.msra.mxu0 0
        %587 = vmatpush.bf16.msra.mxu0 0
        %588 = vmatpush.bf16.msra.mxu0 0
        %589 = vmatpush.bf16.msra.mxu0 0
        %590 = vmatpush.bf16.msra.mxu0 0
        %591 = vmatpush.bf16.msra.mxu0 0
        %592 = vmatpush.bf16.msra.mxu0 0
        %593 = vmatpush.bf16.msra.mxu0 %v581
        %594 = vmatmul.bf16.gmra.mxu0 %v584
        %v595 = vpop.f32.mrf.mxu0
        %v596 = vadd.f32 %v551, %v595
        %v597 = vpop.f32.mrf.mxu0
        %598 = vdwg.mxu0
        %v601 = vunpack.c.l.b16 %v542
        %v602 = vunpack.c.l.b16 %v543
        %v603 = vpack.c.b16 %v602, %v601
        %v606 = vsel %vm560, %v536, 0
        %608 = vmatpush.bf16.msra.mxu0 0
        %609 = vmatpush.bf16.msra.mxu0 0
        %610 = vmatpush.bf16.msra.mxu0 0
        %611 = vmatpush.bf16.msra.mxu0 0
        %612 = vmatpush.bf16.msra.mxu0 0
        %613 = vmatpush.bf16.msra.mxu0 0
        %614 = vmatpush.bf16.msra.mxu0 0
        %615 = vmatpush.bf16.msra.mxu0 %v603
        %616 = vmatmul.bf16.gmra.mxu0 %v606
        %v617 = vpop.f32.mrf.mxu0
        %v618 = vadd.f32 %v552, %v617
        %v619 = vpop.f32.mrf.mxu0
        %620 = vdwg.mxu0
        %v623 = vunpack.c.l.b16 %v544
        %v624 = vunpack.c.l.b16 %v545
        %v625 = vpack.c.b16 %v624, %v623
        %v628 = vsel %vm560, %v537, 0
        %630 = vmatpush.bf16.msra.mxu0 0
        %631 = vmatpush.bf16.msra.mxu0 0
        %632 = vmatpush.bf16.msra.mxu0 0
        %633 = vmatpush.bf16.msra.mxu0 0
        %634 = vmatpush.bf16.msra.mxu0 0
        %635 = vmatpush.bf16.msra.mxu0 0
        %636 = vmatpush.bf16.msra.mxu0 0
        %637 = vmatpush.bf16.msra.mxu0 %v625
        %638 = vmatmul.bf16.gmra.mxu0 %v628
        %v639 = vpop.f32.mrf.mxu0
        %v640 = vadd.f32 %v553, %v639
        %v641 = vpop.f32.mrf.mxu0
        %642 = vdwg.mxu0
        %v643 = vld [vmem:[#allocation7] sm:$0xff]
        %v644 = vadd.f32 %v574, %v643
        %v645 = vadd.f32 %v596, %v643
        %v646 = vadd.f32 %v618, %v643
        %v647 = vadd.f32 %v640, %v643
        %v648 = vld [vmem:[%s419] sm:$0x1]
        %v649 = vld [vmem:[%s419 + $0x1] sm:$0x1]
        %v650 = vld [vmem:[%s419 + $0x2] sm:$0x1]
        %v651 = vld [vmem:[%s419 + $0x3] sm:$0x1]
        %v656 = vperm.slane %v648, 0
        %v657 = vperm.slane %v649, 0
        %v658 = vperm.slane %v650, 0
        %v659 = vperm.slane %v651, 0
        %v664 = vadd.f32 %v644, %v656
        %v665 = vadd.f32 %v645, %v657
        %v666 = vadd.f32 %v646, %v658
        %v667 = vadd.f32 %v647, %v659
        %vm668 = vcmask 64512
        %669 = vst.msk [vmem:[%s489] sm:$0xff] %vm668, %v664
        %670 = vst.msk [vmem:[%s489 + $0x8] sm:$0xff] %vm668, %v665
        %671 = vst.msk [vmem:[%s489 + $0x10] sm:$0xff] %vm668, %v666
        %672 = vst.msk [vmem:[%s489 + $0x18] sm:$0xff] %vm668, %v667
        %v673 = vsel %vm668, %v664, -inf
        %674 = vmax.xlane.f32.xlu0 %v673
        %v675 = vpop.xlane.xlu0 %674
        %v676 = vsel %vm668, %v665, -inf
        %677 = vmax.xlane.f32.xlu0 %v676
        %v678 = vpop.xlane.xlu0 %677
        %v679 = vsel %vm668, %v666, -inf
        %680 = vmax.xlane.f32.xlu0 %v679
        %v681 = vpop.xlane.xlu0 %680
        %v682 = vsel %vm668, %v667, -inf
        %683 = vmax.xlane.f32.xlu0 %v682
        %v684 = vpop.xlane.xlu0 %683
        %v685 = vsub.f32 %v664, %v675
        %v686 = vsub.f32 %v665, %v678
        %v687 = vsub.f32 %v666, %v681
        %v688 = vsub.f32 %v667, %v684
        %v689 = vmul.f32 %v685, 1.442695
        %v690 = vpow.pop %v689
        %v691 = vmul.f32 %v686, 1.442695
        %v692 = vpow.pop %v691
        %v693 = vmul.f32 %v687, 1.442695
        %v694 = vpow.pop %v693
        %v695 = vmul.f32 %v688, 1.442695
        %v696 = vpow.pop %v695
        %v697 = vsel %vm668, %v690, 0.0
        %698 = vadd.xlane.f32.xlu0 %v697
        %v699 = vpop.xlane.xlu0 %698
        %v700 = vsel %vm668, %v692, 0.0
        %701 = vadd.xlane.f32.xlu0 %v700
        %v702 = vpop.xlane.xlu0 %701
        %v703 = vsel %vm668, %v694, 0.0
        %704 = vadd.xlane.f32.xlu0 %v703
        %v705 = vpop.xlane.xlu0 %704
        %v706 = vsel %vm668, %v696, 0.0
        %707 = vadd.xlane.f32.xlu0 %v706
        %v708 = vpop.xlane.xlu0 %707
        %v709 = vrcp.pop %v699
        %v710 = vrcp.pop %v702
        %v711 = vrcp.pop %v705
        %v712 = vrcp.pop %v708
        %v713 = vmul.f32 %v690, %v709
        %v714 = vmul.f32 %v692, %v710
        %v715 = vmul.f32 %v694, %v711
        %v716 = vmul.f32 %v696, %v712
        %v717 = vpack.c.bf16 %v713, %v713
        %v718 = vpack.c.bf16 %v714, %v714
        %v719 = vpack.c.bf16 %v715, %v715
        %v720 = vpack.c.bf16 %v716, %v716
        %721 = vst.msk [vmem:[%s482] sm:$0xff] %vm668, %v713
        %722 = vst.msk [vmem:[%s482 + $0x8] sm:$0xff] %vm668, %v714
        %723 = vst.msk [vmem:[%s482 + $0x10] sm:$0xff] %vm668, %v715
        %724 = vst.msk [vmem:[%s482 + $0x18] sm:$0xff] %vm668, %v716
        %v726 = vsel %vm668, %v717, 0
        %vm728 = vcmask 1043456
        %v730 = vsel %vm728, %v546, 0
        %732 = vmatpush.bf16.msra.mxu0 0
        %733 = vmatpush.bf16.msra.mxu0 0
        %734 = vmatpush.bf16.msra.mxu0 0
        %735 = vmatpush.bf16.msra.mxu0 0
        %736 = vmatpush.bf16.msra.mxu0 0
        %737 = vmatpush.bf16.msra.mxu0 0
        %738 = vmatpush.bf16.msra.mxu0 0
        %739 = vmatpush.bf16.msra.mxu0 %v730
        %740 = vmatmul.bf16.gmra.mxu0 %v726
        %v741 = vpop.f32.mrf.mxu0
        %v742 = vadd.f32 0.0, %v741
        %v743 = vpop.f32.mrf.mxu0
        %744 = vdwg.mxu0
        %745 = vst.msk [vmem:[%s475] sm:$0xff] %vm560, %v742
        %v747 = vsel %vm668, %v718, 0
        %v750 = vsel %vm728, %v547, 0
        %752 = vmatpush.bf16.msra.mxu0 0
        %753 = vmatpush.bf16.msra.mxu0 0
        %754 = vmatpush.bf16.msra.mxu0 0
        %755 = vmatpush.bf16.msra.mxu0 0
        %756 = vmatpush.bf16.msra.mxu0 0
        %757 = vmatpush.bf16.msra.mxu0 0
        %758 = vmatpush.bf16.msra.mxu0 0
        %759 = vmatpush.bf16.msra.mxu0 %v750
        %760 = vmatmul.bf16.gmra.mxu0 %v747
        %v761 = vpop.f32.mrf.mxu0
        %v762 = vadd.f32 0.0, %v761
        %v763 = vpop.f32.mrf.mxu0
        %764 = vdwg.mxu0
        %766 = vrot.lane.b32.xlu0 %v762, 16
        %v767 = vpop.permute.xlu0 %766
        %vm769 = vcmask 261248
        %770 = vst.msk [vmem:[%s475] sm:$0xff] %vm769, %v767
        %v772 = vsel %vm668, %v719, 0
        %v775 = vsel %vm728, %v548, 0
        %777 = vmatpush.bf16.msra.mxu0 0
        %778 = vmatpush.bf16.msra.mxu0 0
        %779 = vmatpush.bf16.msra.mxu0 0
        %780 = vmatpush.bf16.msra.mxu0 0
        %781 = vmatpush.bf16.msra.mxu0 0
        %782 = vmatpush.bf16.msra.mxu0 0
        %783 = vmatpush.bf16.msra.mxu0 0
        %784 = vmatpush.bf16.msra.mxu0 %v775
        %785 = vmatmul.bf16.gmra.mxu0 %v772
        %v786 = vpop.f32.mrf.mxu0
        %v787 = vadd.f32 0.0, %v786
        %v788 = vpop.f32.mrf.mxu0
        %789 = vdwg.mxu0
        %791 = vrot.lane.b32.xlu0 %v787, 32
        %v792 = vpop.permute.xlu0 %791
        %vm794 = vcmask 392448
        %795 = vst.msk [vmem:[%s475] sm:$0xff] %vm794, %v792
        %v797 = vsel %vm668, %v720, 0
        %v800 = vsel %vm728, %v549, 0
        %802 = vmatpush.bf16.msra.mxu0 0
        %803 = vmatpush.bf16.msra.mxu0 0
        %804 = vmatpush.bf16.msra.mxu0 0
        %805 = vmatpush.bf16.msra.mxu0 0
        %806 = vmatpush.bf16.msra.mxu0 0
        %807 = vmatpush.bf16.msra.mxu0 0
        %808 = vmatpush.bf16.msra.mxu0 0
        %809 = vmatpush.bf16.msra.mxu0 %v800
        %810 = vmatmul.bf16.gmra.mxu0 %v797
        %v811 = vpop.f32.mrf.mxu0
        %v812 = vadd.f32 0.0, %v811
        %v813 = vpop.f32.mrf.mxu0
        %814 = vdwg.mxu0
        %816 = vrot.lane.b32.xlu0 %v812, 48
        %v817 = vpop.permute.xlu0 %816
        %vm819 = vcmask 523648
        %820 = vst.msk [vmem:[%s475] sm:$0xff] %vm819, %v817
        %s821 = sand.u32 %s214, 1
        %s822 = scalar_lea.sflag [#allocation6], %s821
        %s823 = sand.u32 %s214, 1
        %s824 = smul.addr %s823, 8
        %s825 = scalar_lea.vmem [#allocation10], %s824
        %s826 = sand.u32 %s32, 1
        %s827 = scalar_lea.sflag [#allocation12], %s826
        %s828 = sand.u32 %s242, 1
        %s829 = smul.addr %s828, 32
        %s830 = scalar_lea.vmem [#allocation11], %s829
        %s831 = sand.u32 %s32, 1
        %s832 = scalar_lea.sflag [#allocation12], %s831
        %s833 = sand.u32 %s270, 1
        %s834 = smul.addr %s833, 32
        %s835 = scalar_lea.vmem [#allocation13], %s834
        // Predicated region
        $region57: #{tpu_custom_call.1} parent=43 // pred_check
          %p836 = pneg %p224
        $region58: #{tpu_custom_call.1} parent=43 // pred_check_branch
          %838 = sbr.rel (%p836) target = $region60
        $region59: #{tpu_custom_call.1} parent=43 // pred_region
          %840 = vsyncadd %s822, 0
          %s841 = sadd.s32 %s37, %s36
          %s842 = smul.addr %s841, 8
          %s843 = scalar_lea.hbm %s7, %s842
          %s845 = sshll.u32 %s825, 4
          %s846 = int_to_ptr.vmem [resolvable:$true] %s845
          %s847 = sshll.u32 %s843, 4
          %s848 = int_to_ptr.hbm [resolvable:$true] %s847
          %850 = dma.vmem_to_hbm [thread:$0]  %s846, 128, %s848, %s822
        $region60: #{tpu_custom_call.1} parent=43 // pred_fallthru
          _
        // Predicated region
        $region61: #{tpu_custom_call.1} parent=43 // pred_check
          %p851 = pneg %p252
        $region62: #{tpu_custom_call.1} parent=43 // pred_check_branch
          %853 = sbr.rel (%p851) target = $region64
        $region63: #{tpu_custom_call.1} parent=43 // pred_region
          %s854 = smul.u32 4, %s36
          %856 = vsyncadd %s827, 0
          %s857 = sadd.s32 %s37, %s854
          %s858 = smul.addr %s857, 8
          %s859 = scalar_lea.hbm %s8, %s858
          %s860 = sshll.u32 %s830, 4
          %s861 = int_to_ptr.vmem [resolvable:$true] %s860
          %s862 = sshll.u32 %s859, 4
          %s863 = int_to_ptr.hbm [resolvable:$true] %s862
          %868 = dma.vmem_to_hbm [thread:$0]  %s861, 512, %s863, %s827, 128, 128, 8
        $region64: #{tpu_custom_call.1} parent=43 // pred_fallthru
          _
        // Predicated region
        $region65: #{tpu_custom_call.1} parent=43 // pred_check
          %p869 = pneg %p280
        $region66: #{tpu_custom_call.1} parent=43 // pred_check_branch
          %871 = sbr.rel (%p869) target = $region68
        $region67: #{tpu_custom_call.1} parent=43 // pred_region
          %s872 = smul.u32 4, %s36
          %874 = vsyncadd %s832, 0
          %s875 = sadd.s32 %s37, %s872
          %s876 = smul.addr %s875, 8
          %s877 = scalar_lea.hbm %s9, %s876
          %s878 = sshll.u32 %s835, 4
          %s879 = int_to_ptr.vmem [resolvable:$true] %s878
          %s880 = sshll.u32 %s877, 4
          %s881 = int_to_ptr.hbm [resolvable:$true] %s880
          %886 = dma.vmem_to_hbm [thread:$0]  %s879, 512, %s881, %s832, 128, 128, 8
        $region68: #{tpu_custom_call.1} parent=43 // pred_fallthru
          _
      $region44: #{tpu_custom_call.1} parent=5 // pred_fallthru
        _
      %p887 = scmp.le.s32.totalorder 2, %s27
      // Predicated region
      $region69: #{tpu_custom_call.1} parent=5 // pred_check
        %p888 = pneg %p887
      $region70: #{tpu_custom_call.1} parent=5 // pred_check_branch
        %890 = sbr.rel (%p888) target = $region72
      $region71: #{tpu_custom_call.1} parent=5 // pred_region
        %s891 = ssub.s32 %s27, 2
        // Predicated region
        $region73: #{tpu_custom_call.1} parent=71 // pred_check
          %p892 = pneg %p230
        $region74: #{tpu_custom_call.1} parent=71 // pred_check_branch
          %894 = sbr.rel (%p892) target = $region76
        $region75: #{tpu_custom_call.1} parent=71 // pred_region
          %s895 = sand.u32 %s215, 1
          %s896 = scalar_lea.sflag [#allocation6], %s895
          %s897 = sand.u32 %s215, 1
          %s898 = smul.addr %s897, 8
          %s899 = scalar_lea.vmem [#allocation10], %s898
          %901 = dma.done %s896, 128
        $region76: #{tpu_custom_call.1} parent=71 // pred_fallthru
          _
        // Predicated region
        $region77: #{tpu_custom_call.1} parent=71 // pred_check
          %p902 = pneg %p258
        $region78: #{tpu_custom_call.1} parent=71 // pred_check_branch
          %904 = sbr.rel (%p902) target = $region80
        $region79: #{tpu_custom_call.1} parent=71 // pred_region
          %s905 = sand.u32 %s33, 1
          %s906 = scalar_lea.sflag [#allocation12], %s905
          %s907 = sand.u32 %s243, 1
          %s908 = smul.addr %s907, 32
          %s909 = scalar_lea.vmem [#allocation11], %s908
          %911 = dma.done %s906, 512
        $region80: #{tpu_custom_call.1} parent=71 // pred_fallthru
          _
        // Predicated region
        $region81: #{tpu_custom_call.1} parent=71 // pred_check
          %p912 = pneg %p286
        $region82: #{tpu_custom_call.1} parent=71 // pred_check_branch
          %914 = sbr.rel (%p912) target = $region84
        $region83: #{tpu_custom_call.1} parent=71 // pred_region
          %s915 = sand.u32 %s33, 1
          %s916 = scalar_lea.sflag [#allocation12], %s915
          %s917 = sand.u32 %s271, 1
          %s918 = smul.addr %s917, 32
          %s919 = scalar_lea.vmem [#allocation13], %s918
          %921 = dma.done %s916, 512
        $region84: #{tpu_custom_call.1} parent=71 // pred_fallthru
          _
      $region72: #{tpu_custom_call.1} parent=5 // pred_fallthru
        _
    $region6: #{tpu_custom_call.1} parent=1 // loop_footer
      %s31 = sadd.s32 1, %s27
    $region7: #{tpu_custom_call.1} parent=1 // loop_footer_branch
      %26 = sbr.rel target = $region3
    $region8: #{tpu_custom_call.1} parent=1 // loop_exit
      _
    %922 = vsyncpa [#allocation5], 1
    %s923 = scalar_lea.sflag [#allocation5], 1
    %924 = vsyncpa %s923, 1
    %925 = vsyncpa [#allocation8], 1
    %926 = vsyncpa [#allocation6], 1
    %s927 = scalar_lea.sflag [#allocation6], 1
    %928 = vsyncpa %s927, 1
    %929 = vsyncpa [#allocation12], 1
    %s930 = scalar_lea.sflag [#allocation12], 1
    %931 = vsyncpa %s930, 1

</llo_original>
